<compile_context>
chip_gen: v7x
topology: tpu7x:2x2x1
jax: 0.10.0
libtpu: 0.0.40
codegen_flags: <defaults>
</compile_context>

<pallas_src>
import jax
import jax.numpy as jnp
from jax.experimental import pallas as pl
from jax.experimental.pallas import tpu as pltpu


def _detect_num_cores():
    """Best-effort TensorCore count per chip (1 on v5e/v6e, 2 on v7x)."""
    try:
        info = pltpu.get_tpu_info()
    except Exception:
        return 1
    for name in ("num_cores", "core_count", "num_tensorcores",
                 "tensorcores_per_chip"):
        v = getattr(info, name, None)
        if isinstance(v, int) and v > 0:
            return v
    # Heuristic: v7x has 64 MiB VMEM per TensorCore and 2 TCs per chip;
    # v5e/v6e have 128 MiB and a single TensorCore.
    vmem = getattr(info, "vmem_capacity_bytes", None)
    if isinstance(vmem, int) and 0 < vmem <= 64 * 1024 * 1024:
        return 2
    return 1


def dice_loss_2(inputs, target, n_classes, weight=None, softmax=False,
                num_cores=None, target_tile_bytes=1 << 20):
    """JAX/Pallas equivalent of DiceLoss_2.forward.

    inputs: (N, C, H, W) float logits/probabilities (NCHW, like PyTorch)
    target: (N, H, W) integer class labels
    """
    assert inputs.shape[1] == n_classes, (
        f"predict {inputs.shape} & target one-hot ({n_classes} classes) shape "
        "do not match")
    assert inputs.shape[0] == target.shape[0] and inputs.shape[2:] == target.shape[1:], (
        f"predict {inputs.shape} & target {target.shape} shape do not match")

    N, C, H, W = inputs.shape
    HW = H * W

    # Free reshapes only (no transpose, no pad).  bf16 scores are upcast
    # inside the kernel; accumulation is always f32.
    if not jnp.issubdtype(inputs.dtype, jnp.floating):
        inputs = inputs.astype(jnp.float32)
    scores = inputs.reshape(N, C, HW)
    labels = target.reshape(N, 1, HW)
    if labels.dtype != jnp.int32:
        # No standalone cast is added when target is already int32; narrower
        # integer label planes could be passed through to cut label DMA.
        labels = labels.astype(jnp.int32)

    dtype_bytes = jnp.dtype(scores.dtype).itemsize
    lanes_hw = pl.cdiv(HW, 128) * 128

    # --- Byte-targeted, generation-safe tile width -------------------------
    # Aim for ~target_tile_bytes of score data per grid step (>= 512 lanes)
    # so the ~0.35 us per-step pipeline overhead is amortised; cap by H*W and
    # by a VMEM budget that counts double-buffered inputs plus ~8 live f32
    # (C, tm) temporaries, leaving headroom under the 32 MiB scoped limit
    # (safe on v7x's 64 MiB VMEM as well as v5e/v6e's 128 MiB).
    tm = max(512, pl.cdiv(target_tile_bytes, max(C, 1) * dtype_bytes))
    tm = pl.cdiv(tm, 128) * 128
    bytes_per_lane = 2 * (C * dtype_bytes + 4) + 8 * C * 4
    vmem_budget = 20 * 1024 * 1024
    max_tm = max(128, (vmem_budget // bytes_per_lane) // 128 * 128)
    tm = min(tm, max_tm, lanes_hw)

    num_tiles = pl.cdiv(HW, tm)
    if num_cores is None:
        num_cores = _detect_num_cores()
    P = max(1, min(num_cores, num_tiles))        # cores sharding the tile loop
    tiles_per_core = pl.cdiv(num_tiles, P)

    def tile_index(p, n, m):
        # Clamp so the DMA never points at a block fully outside the array;
        # the in-kernel mask uses the UNCLAMPED tile index, so clamped
        # (overhang) tiles contribute exactly zero.  Keep that invariant.
        t = jnp.minimum(p * tiles_per_core + m, num_tiles - 1)
        return (n, 0, t)

    def kernel(score_ref, labels_ref, int_ref, y_ref, z_ref):
        p = pl.program_id(0)
        n = pl.program_id(1)
        m = pl.program_id(2)

        # Output block indices depend only on p -> resident per-core accumulators.
        @pl.when(jnp.logical_and(n == 0, m == 0))
        def _():
            int_ref[...] = jnp.zeros_like(int_ref)
            y_ref[...] = jnp.zeros_like(y_ref)
            z_ref[...] = jnp.zeros_like(z_ref)

        s = score_ref[...].astype(jnp.float32)            # (C, tm)
        lab = labels_ref[...]                             # (1, tm) int32

        if softmax:
            # Fused softmax over the (resident) class axis: zero extra HBM
            # bytes; exp / reciprocal use the otherwise-idle EUP slot.  One
            # Newton step restores full precision on the cheap (1, tm) row.
            s = s - jnp.max(s, axis=0, keepdims=True)
            e = jnp.exp(s)
            denom = jnp.sum(e, axis=0, keepdims=True)     # (1, tm)
            inv = pl.reciprocal(denom, approx=True)
            inv = inv * (2.0 - denom * inv)
            s = e * inv

        # Scalar "columns remaining" for this (unclamped) tile: >= tm for
        # interior tiles, in (0, tm) for the ragged tail, <= 0 for overhang
        # tiles created by the P-way split (their contribution must be zero).
        tile = p * tiles_per_core + m
        rem = HW - tile * tm
        lane = jax.lax.broadcasted_iota(jnp.int32, (1, tm), 1)
        valid = lane < rem                                # (1, tm)

        labv = jnp.where(valid, lab, -1)                  # invalid lanes -> no class
        cls = jax.lax.broadcasted_iota(jnp.int32, (C, tm), 0)
        onehot = (labv == cls).astype(jnp.float32)        # in-kernel one-hot (reused)
        sm = jnp.where(valid, s, 0.0)                     # masked scores (z_sum safe,
                                                          # also kills OOB garbage/NaN)

        int_ref[...] += jnp.sum(sm * onehot, axis=-1, keepdims=True)   # (C, 1)
        y_ref[...] += jnp.sum(onehot, axis=-1, keepdims=True)          # (C, 1)
        z_ref[...] += jnp.sum(sm * sm, axis=-1, keepdims=True)         # (C, 1)

    cost = pl.CostEstimate(
        flops=8 * N * C * HW,
        transcendentals=(N * C * HW) if softmax else 0,
        bytes_accessed=N * C * HW * dtype_bytes + N * HW * 4 + 3 * P * C * 4)

    acc_shape = jax.ShapeDtypeStruct((P, C, 1), jnp.float32)
    acc_spec = pl.BlockSpec((None, C, 1), lambda p, n, m: (p, 0, 0))

    intersect_p, y_sum_p, z_sum_p = pl.pallas_call(
        kernel,
        out_shape=(acc_shape, acc_shape, acc_shape),
        grid_spec=pltpu.PrefetchScalarGridSpec(
            num_scalar_prefetch=0,
            grid=(P, N, tiles_per_core),
            in_specs=[
                pl.BlockSpec((None, C, tm), tile_index),
                pl.BlockSpec((None, 1, tm), tile_index),
            ],
            out_specs=[acc_spec, acc_spec, acc_spec],
        ),
        compiler_params=pltpu.CompilerParams(
            dimension_semantics=("parallel", "arbitrary", "arbitrary"),
            vmem_limit_bytes=32 * 1024 * 1024),
        cost_estimate=cost,
    )(scores, labels)

    # Tiny plain-JAX epilogue: sum the per-core partial slabs and form dice.
    intersect = jnp.sum(intersect_p, axis=0)[:, 0]
    y_sum = jnp.sum(y_sum_p, axis=0)[:, 0]
    z_sum = jnp.sum(z_sum_p, axis=0)[:, 0]
    smooth = 1e-5
    dice = 1.0 - (2.0 * intersect + smooth) / (z_sum + y_sum + smooth)

    if weight is None:
        weight = jnp.ones((n_classes,), jnp.float32)
    else:
        weight = jnp.asarray(weight, jnp.float32)
    return jnp.sum(dice * weight) / n_classes


def _dice_loss_ref(inputs, target, n_classes, weight=None, softmax=False):
    """Pure-JAX reference matching the PyTorch module semantics."""
    if softmax:
        inputs = jax.nn.softmax(inputs, axis=1)
    one_hot = (target[:, None, :, :] ==
               jnp.arange(n_classes)[None, :, None, None]).astype(jnp.float32)
    if weight is None:
        weight = [1.0] * n_classes
    smooth = 1e-5
    loss = 0.0
    for i in range(n_classes):
        s = inputs[:, i].astype(jnp.float32)
        t = one_hot[:, i]
        intersect = jnp.sum(s * t)
        y = jnp.sum(t * t)
        z = jnp.sum(s * s)
        loss += (1.0 - (2.0 * intersect + smooth) / (z + y + smooth)) * weight[i]
    return loss / n_classes


if __name__ == "__main__":
    key = jax.random.PRNGKey(0)
    k1, k2 = jax.random.split(key)

    N, C, H, W = 2, 4, 16, 16
    inputs = jax.random.uniform(k1, (N, C, H, W), dtype=jnp.float32)
    target = jax.random.randint(k2, (N, H, W), 0, C, dtype=jnp.int32)

    # Probabilities-as-given path (softmax=False), tight tolerance.
    loss = jax.block_until_ready(dice_loss_2(inputs, target, n_classes=C))
    ref = _dice_loss_ref(inputs, target, n_classes=C)
    assert jnp.allclose(loss, ref, rtol=1e-5, atol=1e-5), (loss, ref)

    # Class-weighted path.
    w = [0.5, 1.0, 1.5, 2.0]
    loss_w = jax.block_until_ready(
        dice_loss_2(inputs, target, n_classes=C, weight=w))
    ref_w = _dice_loss_ref(inputs, target, n_classes=C, weight=w)
    assert jnp.allclose(loss_w, ref_w, rtol=1e-5, atol=1e-5), (loss_w, ref_w)

    # Fused in-kernel softmax path (slightly looser tolerance for the EUP
    # reciprocal + different summation order).
    loss_sm = jax.block_until_ready(
        dice_loss_2(inputs, target, n_classes=C, softmax=True))
    ref_sm = _dice_loss_ref(inputs, target, n_classes=C, softmax=True)
    assert jnp.allclose(loss_sm, ref_sm, rtol=1e-3, atol=1e-3), (loss_sm, ref_sm)

    print("KERNEL_OK")
</pallas_src>

<mosaic_0001>
module attributes {stable_mosaic.version = 11 : i64} {
  func.func @kernel(%arg0: i32, %arg1: i32, %arg2: i32, %arg3: memref<1x4x256xf32, #tpu.memory_space<vmem>>, %arg4: memref<1x1x256xi32, #tpu.memory_space<vmem>>, %arg5: memref<1x4x1xf32, #tpu.memory_space<vmem>>, %arg6: memref<1x4x1xf32, #tpu.memory_space<vmem>>, %arg7: memref<1x4x1xf32, #tpu.memory_space<vmem>>) attributes {dimension_semantics = [#tpu.dimension_semantics<parallel>, #tpu.dimension_semantics<arbitrary>, #tpu.dimension_semantics<arbitrary>], iteration_bounds = array<i64: 1, 2, 1>, scalar_prefetch = 0 : i64, scratch_operands = 0 : i64, tpu.core_type = #tpu.core_type<tc>, window_params = [{transform_indices = @transform_0, window_bounds = array<i64: 1, 4, 256>}, {transform_indices = @transform_1, window_bounds = array<i64: 1, 1, 256>}, {transform_indices = @transform_2, window_bounds = array<i64: 1, 4, 1>}, {transform_indices = @transform_3, window_bounds = array<i64: 1, 4, 1>}, {transform_indices = @transform_4, window_bounds = array<i64: 1, 4, 1>}]} {
    %c0_i32 = arith.constant 0 : i32
    %0 = arith.cmpi eq, %arg1, %c0_i32 : i32
    %c0_i32_0 = arith.constant 0 : i32
    %1 = arith.cmpi eq, %arg2, %c0_i32_0 : i32
    %2 = arith.andi %0, %1 : i1
    %3 = arith.extui %2 : i1 to i32
    %c0_i32_1 = arith.constant 0 : i32
    %4 = arith.cmpi ne, %3, %c0_i32_1 : i32
    scf.if %4 {
      %cst_29 = arith.constant 0.000000e+00 : f32
      %53 = vector.broadcast %cst_29 : f32 to vector<4x1xf32>
      %c0_30 = arith.constant 0 : index
      %c0_31 = arith.constant 0 : index
      %c0_32 = arith.constant 0 : index
      %54 = vector.load %arg5[%c0_30, %c0_31, %c0_32] : memref<1x4x1xf32, #tpu.memory_space<vmem>>, vector<1x4x1xf32>
      %55 = vector.shape_cast %54 : vector<1x4x1xf32> to vector<4x1xf32>
      %56 = vector.shape_cast %53 : vector<4x1xf32> to vector<1x4x1xf32>
      tpu.vector_store %arg5[%c0_30, %c0_31, %c0_32], %56 {strides = array<i32>} : memref<1x4x1xf32, #tpu.memory_space<vmem>>, vector<1x4x1xf32>,
      %cst_33 = arith.constant 0.000000e+00 : f32
      %57 = vector.broadcast %cst_33 : f32 to vector<4x1xf32>
      %c0_34 = arith.constant 0 : index
      %c0_35 = arith.constant 0 : index
      %c0_36 = arith.constant 0 : index
      %58 = vector.load %arg6[%c0_34, %c0_35, %c0_36] : memref<1x4x1xf32, #tpu.memory_space<vmem>>, vector<1x4x1xf32>
      %59 = vector.shape_cast %58 : vector<1x4x1xf32> to vector<4x1xf32>
      %60 = vector.shape_cast %57 : vector<4x1xf32> to vector<1x4x1xf32>
      tpu.vector_store %arg6[%c0_34, %c0_35, %c0_36], %60 {strides = array<i32>} : memref<1x4x1xf32, #tpu.memory_space<vmem>>, vector<1x4x1xf32>,
      %cst_37 = arith.constant 0.000000e+00 : f32
      %61 = vector.broadcast %cst_37 : f32 to vector<4x1xf32>
      %c0_38 = arith.constant 0 : index
      %c0_39 = arith.constant 0 : index
      %c0_40 = arith.constant 0 : index
      %62 = vector.load %arg7[%c0_38, %c0_39, %c0_40] : memref<1x4x1xf32, #tpu.memory_space<vmem>>, vector<1x4x1xf32>
      %63 = vector.shape_cast %62 : vector<1x4x1xf32> to vector<4x1xf32>
      %64 = vector.shape_cast %61 : vector<4x1xf32> to vector<1x4x1xf32>
      tpu.vector_store %arg7[%c0_38, %c0_39, %c0_40], %64 {strides = array<i32>} : memref<1x4x1xf32, #tpu.memory_space<vmem>>, vector<1x4x1xf32>,
    } else {
    }
    %c0 = arith.constant 0 : index
    %c0_2 = arith.constant 0 : index
    %c0_3 = arith.constant 0 : index
    %5 = vector.load %arg3[%c0, %c0_2, %c0_3] : memref<1x4x256xf32, #tpu.memory_space<vmem>>, vector<1x4x256xf32>
    %6 = vector.shape_cast %5 : vector<1x4x256xf32> to vector<4x256xf32>
    %c0_4 = arith.constant 0 : index
    %c0_5 = arith.constant 0 : index
    %c0_6 = arith.constant 0 : index
    %7 = vector.load %arg4[%c0_4, %c0_5, %c0_6] : memref<1x1x256xi32, #tpu.memory_space<vmem>>, vector<1x1x256xi32>
    %8 = vector.shape_cast %7 : vector<1x1x256xi32> to vector<1x256xi32>
    %c1_i32 = arith.constant 1 : i32
    %9 = arith.muli %arg0, %c1_i32 : i32
    %10 = arith.addi %9, %arg2 : i32
    %c256_i32 = arith.constant 256 : i32
    %11 = arith.muli %10, %c256_i32 : i32
    %c256_i32_7 = arith.constant 256 : i32
    %12 = arith.subi %c256_i32_7, %11 : i32
    %13 = tpu.iota {dimensions = array<i32: 1>} : vector<1x256xi32>
    %14 = vector.broadcast %12 : i32 to vector<1x256xi32>
    %15 = arith.cmpi slt, %13, %14 : vector<1x256xi32>
    %c-1_i32 = arith.constant -1 : i32
    %16 = vector.broadcast %c-1_i32 : i32 to vector<1x256xi32>
    %17 = arith.select %15, %8, %16 : vector<1x256xi1>, vector<1x256xi32>
    %18 = tpu.iota {dimensions = array<i32: 0>} : vector<4x256xi32>
    %19 = vector.broadcast %17 : vector<1x256xi32> to vector<4x256xi32>
    %20 = arith.cmpi eq, %19, %18 : vector<4x256xi32>
    %21 = arith.extui %20 : vector<4x256xi1> to vector<4x256xi32>
    %22 = arith.sitofp %21 : vector<4x256xi32> to vector<4x256xf32>
    %cst = arith.constant 0.000000e+00 : f32
    %23 = vector.shape_cast %15 : vector<1x256xi1> to vector<1x256xi1>
    %24 = vector.broadcast %23 : vector<1x256xi1> to vector<4x256xi1>
    %25 = vector.broadcast %cst : f32 to vector<4x256xf32>
    %26 = arith.select %24, %6, %25 : vector<4x256xi1>, vector<4x256xf32>
    %c0_8 = arith.constant 0 : index
    %c0_9 = arith.constant 0 : index
    %c0_10 = arith.constant 0 : index
    %27 = vector.load %arg5[%c0_8, %c0_9, %c0_10] : memref<1x4x1xf32, #tpu.memory_space<vmem>>, vector<1x4x1xf32>
    %28 = vector.shape_cast %27 : vector<1x4x1xf32> to vector<4x1xf32>
    %29 = arith.mulf %26, %22 : vector<4x256xf32>
    %cst_11 = arith.constant dense<0.000000e+00> : vector<4xf32>
    %30 = vector.multi_reduction <add>, %29, %cst_11 [1] : vector<4x256xf32> to vector<4xf32>
    %31 = vector.shape_cast %30 : vector<4xf32> to vector<4x1xf32>
    %32 = arith.addf %28, %31 : vector<4x1xf32>
    %c0_12 = arith.constant 0 : index
    %c0_13 = arith.constant 0 : index
    %c0_14 = arith.constant 0 : index
    %33 = vector.load %arg5[%c0_12, %c0_13, %c0_14] : memref<1x4x1xf32, #tpu.memory_space<vmem>>, vector<1x4x1xf32>
    %34 = vector.shape_cast %33 : vector<1x4x1xf32> to vector<4x1xf32>
    %35 = vector.shape_cast %32 : vector<4x1xf32> to vector<1x4x1xf32>
    tpu.vector_store %arg5[%c0_12, %c0_13, %c0_14], %35 {strides = array<i32>} : memref<1x4x1xf32, #tpu.memory_space<vmem>>, vector<1x4x1xf32>,
    %c0_15 = arith.constant 0 : index
    %c0_16 = arith.constant 0 : index
    %c0_17 = arith.constant 0 : index
    %36 = vector.load %arg6[%c0_15, %c0_16, %c0_17] : memref<1x4x1xf32, #tpu.memory_space<vmem>>, vector<1x4x1xf32>
    %37 = vector.shape_cast %36 : vector<1x4x1xf32> to vector<4x1xf32>
    %cst_18 = arith.constant dense<0.000000e+00> : vector<4xf32>
    %38 = vector.multi_reduction <add>, %22, %cst_18 [1] : vector<4x256xf32> to vector<4xf32>
    %39 = vector.shape_cast %38 : vector<4xf32> to vector<4x1xf32>
    %40 = arith.addf %37, %39 : vector<4x1xf32>
    %c0_19 = arith.constant 0 : index
    %c0_20 = arith.constant 0 : index
    %c0_21 = arith.constant 0 : index
    %41 = vector.load %arg6[%c0_19, %c0_20, %c0_21] : memref<1x4x1xf32, #tpu.memory_space<vmem>>, vector<1x4x1xf32>
    %42 = vector.shape_cast %41 : vector<1x4x1xf32> to vector<4x1xf32>
    %43 = vector.shape_cast %40 : vector<4x1xf32> to vector<1x4x1xf32>
    tpu.vector_store %arg6[%c0_19, %c0_20, %c0_21], %43 {strides = array<i32>} : memref<1x4x1xf32, #tpu.memory_space<vmem>>, vector<1x4x1xf32>,
    %c0_22 = arith.constant 0 : index
    %c0_23 = arith.constant 0 : index
    %c0_24 = arith.constant 0 : index
    %44 = vector.load %arg7[%c0_22, %c0_23, %c0_24] : memref<1x4x1xf32, #tpu.memory_space<vmem>>, vector<1x4x1xf32>
    %45 = vector.shape_cast %44 : vector<1x4x1xf32> to vector<4x1xf32>
    %46 = arith.mulf %26, %26 : vector<4x256xf32>
    %cst_25 = arith.constant dense<0.000000e+00> : vector<4xf32>
    %47 = vector.multi_reduction <add>, %46, %cst_25 [1] : vector<4x256xf32> to vector<4xf32>
    %48 = vector.shape_cast %47 : vector<4xf32> to vector<4x1xf32>
    %49 = arith.addf %45, %48 : vector<4x1xf32>
    %c0_26 = arith.constant 0 : index
    %c0_27 = arith.constant 0 : index
    %c0_28 = arith.constant 0 : index
    %50 = vector.load %arg7[%c0_26, %c0_27, %c0_28] : memref<1x4x1xf32, #tpu.memory_space<vmem>>, vector<1x4x1xf32>
    %51 = vector.shape_cast %50 : vector<1x4x1xf32> to vector<4x1xf32>
    %52 = vector.shape_cast %49 : vector<4x1xf32> to vector<1x4x1xf32>
    tpu.vector_store %arg7[%c0_26, %c0_27, %c0_28], %52 {strides = array<i32>} : memref<1x4x1xf32, #tpu.memory_space<vmem>>, vector<1x4x1xf32>,
    return
  }
  func.func @transform_0(%arg0: i32, %arg1: i32, %arg2: i32) -> (i32, i32, i32) {
    %c1_i32 = arith.constant 1 : i32
    %0 = arith.muli %arg0, %c1_i32 : i32
    %1 = arith.addi %0, %arg2 : i32
    %c0_i32 = arith.constant 0 : i32
    %2 = arith.minsi %1, %c0_i32 : i32
    %c0_i32_0 = arith.constant 0 : i32
    %c0_i32_1 = arith.constant 0 : i32
    return %arg1, %c0_i32_0, %2 : i32, i32, i32
  }
  func.func @transform_1(%arg0: i32, %arg1: i32, %arg2: i32) -> (i32, i32, i32) {
    %c1_i32 = arith.constant 1 : i32
    %0 = arith.muli %arg0, %c1_i32 : i32
    %1 = arith.addi %0, %arg2 : i32
    %c0_i32 = arith.constant 0 : i32
    %2 = arith.minsi %1, %c0_i32 : i32
    %c0_i32_0 = arith.constant 0 : i32
    %c0_i32_1 = arith.constant 0 : i32
    return %arg1, %c0_i32_0, %2 : i32, i32, i32
  }
  func.func @transform_2(%arg0: i32, %arg1: i32, %arg2: i32) -> (i32, i32, i32) {
    %c0_i32 = arith.constant 0 : i32
    %c0_i32_0 = arith.constant 0 : i32
    %c0_i32_1 = arith.constant 0 : i32
    return %arg0, %c0_i32, %c0_i32_0 : i32, i32, i32
  }
  func.func @transform_3(%arg0: i32, %arg1: i32, %arg2: i32) -> (i32, i32, i32) {
    %c0_i32 = arith.constant 0 : i32
    %c0_i32_0 = arith.constant 0 : i32
    %c0_i32_1 = arith.constant 0 : i32
    return %arg0, %c0_i32, %c0_i32_0 : i32, i32, i32
  }
  func.func @transform_4(%arg0: i32, %arg1: i32, %arg2: i32) -> (i32, i32, i32) {
    %c0_i32 = arith.constant 0 : i32
    %c0_i32_0 = arith.constant 0 : i32
    %c0_i32_1 = arith.constant 0 : i32
    return %arg0, %c0_i32, %c0_i32_0 : i32, i32, i32
  }
}

</mosaic_0001>

<llo_original>
// kernel: tpu_custom_call.1
$region0: #{tpu_custom_call.1}
  #allocation0 [shape = 'u32[]', space=smem, size = 0x4, offset = 0x4, fixed_abs, tag = 'smem constant byte address 0x4 - core index']
  #allocation1 [shape = 'u32[144,128]{1,0:T(1,128)}', space=vmem, size = 0x12000, scoped, tag = 'internal scratch']
  %s0 = inlined_call_operand.hbm [shape: f32[2,4,256], index: 0, kind: input, shape index: {}]
  %s1 = inlined_call_operand.hbm [shape: s32[2,1,256], index: 1, kind: input, shape index: {}]
  %s2 = inlined_call_operand.vmem [shape: f32[1,4,1], index: 2, kind: output, shape index: {0}]
  %s3 = inlined_call_operand.vmem [shape: f32[1,4,1], index: 3, kind: output, shape index: {1}]
  %s4 = inlined_call_operand.vmem [shape: f32[1,4,1], index: 4, kind: output, shape index: {2}]
  %5 = xla_tuple %s2, %s3, %s4
  %s6 = sld [smem:[#allocation0]]
  $region69: #{tpu_custom_call.1} parent=0
    _
  %s8 = ssub.s32 1, %s6
  %s9 = scalar_select 0, %s8, %s6
  $region1: #{tpu_custom_call.1} parent=0
    #allocation2 [shape = 'u8[8192]{0}', space=vmem, size = 0x2000, scoped, tag = 'input window, operand 0']
    #allocation3 [shape = 's32[2]{0}', space=sflag, size = 0x8, scoped, tag = 'scoped memory for tpu_custom_call.1']
    #allocation4 [shape = 'u8[2048]{0}', space=vmem, size = 0x800, scoped, tag = 'input window, operand 1']
    #allocation5 [shape = 's32[2]{0}', space=sflag, size = 0x8, scoped, tag = 'scoped memory for tpu_custom_call.1']
    %10 = vsyncpa [#allocation3], 0
    %s11 = scalar_lea.sflag [#allocation3], 1
    %12 = vsyncpa %s11, 0
    %13 = vsyncpa [#allocation5], 0
    %s14 = scalar_lea.sflag [#allocation5], 1
    %15 = vsyncpa %s14, 0
    loop: start=0, step=1, limit=4
    $region2: #{tpu_custom_call.1} parent=1 // loop_pre_header
      _
    $region3: #{tpu_custom_call.1} parent=1 // loop_header
      %s17 = sphi 0, %s21
      %p18 = scmp.ge.s32.totalorder %s17, 4
      %s24 = sphi 0, %s43
      %s25 = sphi 0, %s39
      %s26 = sphi 0, %s35
      %s27 = sphi 0, %s24
      %s28 = sphi 0, %s25
      %s29 = sphi 0, %s26
      %s30 = sphi 0, %s27
      %s31 = sphi 0, %s28
      %s32 = sphi 0, %s29
      %s54 = sphi 0, %s56
      %s57 = sphi 0, %s54
      %s58 = sphi 0, %s57
      %s74 = sphi 0, %s58
      %s88 = sphi 0, %s90
      %s91 = sphi 0, %s88
      %s92 = sphi 0, %s91
      %s108 = sphi 0, %s92
      %s114 = sphi 0, %s116
      %s117 = sphi 0, %s114
      %s118 = sphi 0, %s117
      %s134 = sphi 0, %s118
      %s140 = sphi 0, %s142
      %s143 = sphi 0, %s140
      %s144 = sphi 0, %s143
      %s160 = sphi 0, %s144
      %s166 = sphi 0, %s168
      %s169 = sphi 0, %s166
      %s170 = sphi 0, %s169
      %s186 = sphi 0, %s170
    $region4: #{tpu_custom_call.1} parent=1 // loop_header_branch
      %20 = sbr.rel (%p18) target = $region8
    $region5: #{tpu_custom_call.1} parent=1 // loop_body
      %s22 = ssub.s32 %s17, 1
      %s23 = ssub.s32 %s17, 2
      %s33 = sadd.s32 1, %s26
      %p34 = scmp.ge.s32.totalorder %s33, 1
      %s35 = scalar_select %p34, 0, %s33
      %s36 = sadd.s32 1, %s25
      %s37 = scalar_select %p34, %s36, %s25
      %p38 = scmp.ge.s32.totalorder %s37, 2
      %s39 = scalar_select %p38, 0, %s37
      %s40 = sadd.s32 1, %s24
      %s41 = scalar_select %p38, %s40, %s24
      %p42 = scmp.ge.s32.totalorder %s41, 1
      %s43 = scalar_select %p42, 0, %s41
      %s44 = sadd.s32 %s24, %s26
      %p45 = scmp.lt.s32.totalorder %s44, 0
      %s46 = scalar_select %p45, %s44, 0
      %s47 = sadd.s32 %s43, %s35
      %p48 = scmp.lt.s32.totalorder %s47, 0
      %s49 = scalar_select %p48, %s47, 0
      %s50 = ssub.s32 %s25, %s39
      %s51 = ssub.s32 %s46, %s49
      %s52 = sor.u32 %s50, %s51
      %p53 = scmp.eq.s32.totalorder %s52, 0
      %s55 = sadd.s32 %s54, 1
      %s56 = scalar_select %p53, %s54, %s55
      %p59 = pneg %p53
      %p60 = scmp.eq.s32.totalorder %s17, 1
      %p61 = por %p59, %p60
      %p62 = scmp.ne.s32.totalorder %s54, %s57
      %p63 = scmp.eq.s32.totalorder %s17, 0
      %p64 = por %p62, %p63
      %p65 = scmp.ne.s32.totalorder %s54, %s57
      %p66 = scmp.eq.s32.totalorder %s22, 1
      %p67 = por %p65, %p66
      %p68 = scmp.ne.s32.totalorder %s57, %s58
      %p69 = scmp.eq.s32.totalorder %s22, 0
      %p70 = por %p68, %p69
      %p71 = scmp.ne.s32.totalorder %s57, %s58
      %p72 = scmp.eq.s32.totalorder %s23, 1
      %p73 = por %p71, %p72
      %p75 = scmp.ne.s32.totalorder %s58, %s74
      %p76 = scmp.eq.s32.totalorder %s23, 0
      %p77 = por %p75, %p76
      %s78 = sadd.s32 %s24, %s26
      %p79 = scmp.lt.s32.totalorder %s78, 0
      %s80 = scalar_select %p79, %s78, 0
      %s81 = sadd.s32 %s43, %s35
      %p82 = scmp.lt.s32.totalorder %s81, 0
      %s83 = scalar_select %p82, %s81, 0
      %s84 = ssub.s32 %s25, %s39
      %s85 = ssub.s32 %s80, %s83
      %s86 = sor.u32 %s84, %s85
      %p87 = scmp.eq.s32.totalorder %s86, 0
      %s89 = sadd.s32 %s88, 1
      %s90 = scalar_select %p87, %s88, %s89
      %p93 = pneg %p87
      %p94 = scmp.eq.s32.totalorder %s17, 1
      %p95 = por %p93, %p94
      %p96 = scmp.ne.s32.totalorder %s88, %s91
      %p97 = scmp.eq.s32.totalorder %s17, 0
      %p98 = por %p96, %p97
      %p99 = scmp.ne.s32.totalorder %s88, %s91
      %p100 = scmp.eq.s32.totalorder %s22, 1
      %p101 = por %p99, %p100
      %p102 = scmp.ne.s32.totalorder %s91, %s92
      %p103 = scmp.eq.s32.totalorder %s22, 0
      %p104 = por %p102, %p103
      %p105 = scmp.ne.s32.totalorder %s91, %s92
      %p106 = scmp.eq.s32.totalorder %s23, 1
      %p107 = por %p105, %p106
      %p109 = scmp.ne.s32.totalorder %s92, %s108
      %p110 = scmp.eq.s32.totalorder %s23, 0
      %p111 = por %p109, %p110
      %s112 = ssub.s32 %s24, %s43
      %p113 = scmp.eq.s32.totalorder %s112, 0
      %s115 = sadd.s32 %s114, 1
      %s116 = scalar_select %p113, %s114, %s115
      %p119 = pneg %p113
      %p120 = scmp.eq.s32.totalorder %s17, 1
      %p121 = por %p119, %p120
      %p122 = scmp.ne.s32.totalorder %s114, %s117
      %p123 = scmp.eq.s32.totalorder %s17, 0
      %p124 = por %p122, %p123
      %p125 = scmp.ne.s32.totalorder %s114, %s117
      %p126 = scmp.eq.s32.totalorder %s22, 1
      %p127 = por %p125, %p126
      %p128 = scmp.ne.s32.totalorder %s117, %s118
      %p129 = scmp.eq.s32.totalorder %s22, 0
      %p130 = por %p128, %p129
      %p131 = scmp.ne.s32.totalorder %s117, %s118
      %p132 = scmp.eq.s32.totalorder %s23, 1
      %p133 = por %p131, %p132
      %p135 = scmp.ne.s32.totalorder %s118, %s134
      %p136 = scmp.eq.s32.totalorder %s23, 0
      %p137 = por %p135, %p136
      %s138 = ssub.s32 %s24, %s43
      %p139 = scmp.eq.s32.totalorder %s138, 0
      %s141 = sadd.s32 %s140, 1
      %s142 = scalar_select %p139, %s140, %s141
      %p145 = pneg %p139
      %p146 = scmp.eq.s32.totalorder %s17, 1
      %p147 = por %p145, %p146
      %p148 = scmp.ne.s32.totalorder %s140, %s143
      %p149 = scmp.eq.s32.totalorder %s17, 0
      %p150 = por %p148, %p149
      %p151 = scmp.ne.s32.totalorder %s140, %s143
      %p152 = scmp.eq.s32.totalorder %s22, 1
      %p153 = por %p151, %p152
      %p154 = scmp.ne.s32.totalorder %s143, %s144
      %p155 = scmp.eq.s32.totalorder %s22, 0
      %p156 = por %p154, %p155
      %p157 = scmp.ne.s32.totalorder %s143, %s144
      %p158 = scmp.eq.s32.totalorder %s23, 1
      %p159 = por %p157, %p158
      %p161 = scmp.ne.s32.totalorder %s144, %s160
      %p162 = scmp.eq.s32.totalorder %s23, 0
      %p163 = por %p161, %p162
      %s164 = ssub.s32 %s24, %s43
      %p165 = scmp.eq.s32.totalorder %s164, 0
      %s167 = sadd.s32 %s166, 1
      %s168 = scalar_select %p165, %s166, %s167
      %p171 = pneg %p165
      %p172 = scmp.eq.s32.totalorder %s17, 1
      %p173 = por %p171, %p172
      %p174 = scmp.ne.s32.totalorder %s166, %s169
      %p175 = scmp.eq.s32.totalorder %s17, 0
      %p176 = por %p174, %p175
      %p177 = scmp.ne.s32.totalorder %s166, %s169
      %p178 = scmp.eq.s32.totalorder %s22, 1
      %p179 = por %p177, %p178
      %p180 = scmp.ne.s32.totalorder %s169, %s170
      %p181 = scmp.eq.s32.totalorder %s22, 0
      %p182 = por %p180, %p181
      %p183 = scmp.ne.s32.totalorder %s169, %s170
      %p184 = scmp.eq.s32.totalorder %s23, 1
      %p185 = por %p183, %p184
      %p187 = scmp.ne.s32.totalorder %s170, %s186
      %p188 = scmp.eq.s32.totalorder %s23, 0
      %p189 = por %p187, %p188
      %p190 = scmp.le.s32.totalorder 1, %s17
      %p191 = scmp.lt.s32.totalorder %s17, 3
      %p192 = pnand %p190, %p191
      %p193 = pneg %p192
      // Predicated region
      $region9: #{tpu_custom_call.1} parent=5 // pred_check
        _
      $region10: #{tpu_custom_call.1} parent=5 // pred_check_branch
        %195 = sbr.rel (%p192) target = $region12
      $region11: #{tpu_custom_call.1} parent=5 // pred_region
        %s196 = ssub.s32 %s17, 1
      $region12: #{tpu_custom_call.1} parent=5 // pred_fallthru
        _
      %p197 = scmp.lt.s32.totalorder %s17, 2
      // Predicated region
      $region13: #{tpu_custom_call.1} parent=5 // pred_check
        %p198 = pneg %p197
      $region14: #{tpu_custom_call.1} parent=5 // pred_check_branch
        %200 = sbr.rel (%p198) target = $region16
      $region15: #{tpu_custom_call.1} parent=5 // pred_region
        // Predicated region
        $region17: #{tpu_custom_call.1} parent=15 // pred_check
          %p201 = pneg %p64
        $region18: #{tpu_custom_call.1} parent=15 // pred_check_branch
          %203 = sbr.rel (%p201) target = $region20
        $region19: #{tpu_custom_call.1} parent=15 // pred_region
          %s204 = sand.u32 %s54, 1
          %s205 = scalar_lea.sflag [#allocation3], %s204
          %s206 = sand.u32 %s54, 1
          %s207 = smul.addr %s206, 8
          %s208 = scalar_lea.vmem [#allocation2], %s207
          %s209 = sadd.s32 %s24, %s26
          %p210 = scmp.lt.s32.totalorder %s209, 0
          %s211 = scalar_select %p210, %s209, 0
          %s212 = smul.u32 2, %s211
          %s214 = ssub.s32 128, 128
          %215 = vsyncadd %s205, %s214
          %s216 = smul.addr %s25, 2
          %s217 = sadd.s32 %s212, %s216
          %s218 = smul.addr %s217, 64
          %s219 = scalar_lea.hbm %s0, %s218
          %s221 = sshll.u32 %s208, 4
          %s222 = int_to_ptr.vmem [resolvable:$true] %s221
          %224 = dma.hbm_to_vmem [thread:$0]  %s219, 128, %s222, %s205
        $region20: #{tpu_custom_call.1} parent=15 // pred_fallthru
          _
        // Predicated region
        $region21: #{tpu_custom_call.1} parent=15 // pred_check
          %p225 = pneg %p98
        $region22: #{tpu_custom_call.1} parent=15 // pred_check_branch
          %227 = sbr.rel (%p225) target = $region24
        $region23: #{tpu_custom_call.1} parent=15 // pred_region
          %s228 = sand.u32 %s88, 1
          %s229 = scalar_lea.sflag [#allocation5], %s228
          %s230 = sand.u32 %s88, 1
          %s231 = smul.addr %s230, 2
          %s232 = scalar_lea.vmem [#allocation4], %s231
          %s233 = sadd.s32 %s24, %s26
          %p234 = scmp.lt.s32.totalorder %s233, 0
          %s235 = scalar_select %p234, %s233, 0
          %s236 = smul.u32 2, %s235
          %s238 = ssub.s32 32, 32
          %239 = vsyncadd %s229, %s238
          %s240 = smul.addr %s25, 2
          %s241 = sadd.s32 %s236, %s240
          %s242 = smul.addr %s241, 16
          %s243 = scalar_lea.hbm %s1, %s242
          %s245 = sshll.u32 %s232, 4
          %s246 = int_to_ptr.vmem [resolvable:$true] %s245
          %248 = dma.hbm_to_vmem [thread:$0]  %s243, 32, %s246, %s229
        $region24: #{tpu_custom_call.1} parent=15 // pred_fallthru
          _
      $region16: #{tpu_custom_call.1} parent=5 // pred_fallthru
        _
      %p249 = scmp.le.s32.totalorder 1, %s17
      %p250 = scmp.lt.s32.totalorder %s17, 3
      %p251 = pnand %p249, %p250
      %p252 = pneg %p251
      // Predicated region
      $region25: #{tpu_custom_call.1} parent=5 // pred_check
        _
      $region26: #{tpu_custom_call.1} parent=5 // pred_check_branch
        %254 = sbr.rel (%p251) target = $region28
      $region27: #{tpu_custom_call.1} parent=5 // pred_region
        %s255 = ssub.s32 %s17, 1
        %s256 = sand.u32 %s57, 1
        %s257 = scalar_lea.sflag [#allocation3], %s256
        %s258 = sand.u32 %s57, 1
        %s259 = smul.addr %s258, 8
        %s260 = scalar_lea.vmem [#allocation2], %s259
        // Predicated region
        $region29: #{tpu_custom_call.1} parent=27 // pred_check
          %p261 = pneg %p70
        $region30: #{tpu_custom_call.1} parent=27 // pred_check_branch
          %263 = sbr.rel (%p261) target = $region32
        $region31: #{tpu_custom_call.1} parent=27 // pred_region
          %264 = dma.done %s257, 128
        $region32: #{tpu_custom_call.1} parent=27 // pred_fallthru
          _
        %s265 = sand.u32 %s91, 1
        %s266 = scalar_lea.sflag [#allocation5], %s265
        %s267 = sand.u32 %s91, 1
        %s268 = smul.addr %s267, 2
        %s269 = scalar_lea.vmem [#allocation4], %s268
        // Predicated region
        $region33: #{tpu_custom_call.1} parent=27 // pred_check
          %p270 = pneg %p104
        $region34: #{tpu_custom_call.1} parent=27 // pred_check_branch
          %272 = sbr.rel (%p270) target = $region36
        $region35: #{tpu_custom_call.1} parent=27 // pred_region
          %273 = dma.done %s266, 32
        $region36: #{tpu_custom_call.1} parent=27 // pred_fallthru
          _
        %s274 = sand.u32 %s57, 1
        %s275 = scalar_lea.sflag [#allocation3], %s274
        %s276 = sand.u32 %s57, 1
        %s277 = smul.addr %s276, 8
        %s278 = scalar_lea.vmem [#allocation2], %s277
        %p279 = pneg %p70
        %p280 = pneg %p67
        %s281 = sand.u32 %s91, 1
        %s282 = scalar_lea.sflag [#allocation5], %s281
        %s283 = sand.u32 %s91, 1
        %s284 = smul.addr %s283, 2
        %s285 = scalar_lea.vmem [#allocation4], %s284
        %p286 = pneg %p104
        %p287 = pneg %p101
        %p288 = pneg %p130
        %p289 = pneg %p127
        %p290 = scmp.lt.s32.totalorder %s27, 0
        %s291 = scalar_select %p290, %s27, 0
        %s292 = smul.addr %s291, 4
        %s293 = scalar_lea.vmem %s2, %s292
        %p294 = pneg %p156
        %p295 = pneg %p153
        %p296 = scmp.lt.s32.totalorder %s27, 0
        %s297 = scalar_select %p296, %s27, 0
        %s298 = smul.addr %s297, 4
        %s299 = scalar_lea.vmem %s3, %s298
        %p300 = pneg %p182
        %p301 = pneg %p179
        %p302 = scmp.lt.s32.totalorder %s27, 0
        %s303 = scalar_select %p302, %s27, 0
        %s304 = smul.addr %s303, 4
        %s305 = scalar_lea.vmem %s4, %s304
        %s306 = sadd.s32 %s27, %s29
        %p307 = scmp.lt.s32.totalorder %s306, 0
        %s308 = scalar_select %p307, %s306, 0
        %s309 = smul.u32 2, %s308
        %s310 = sadd.s32 %s27, %s29
        %p311 = scmp.lt.s32.totalorder %s310, 0
        %s312 = scalar_select %p311, %s310, 0
        %s313 = smul.u32 2, %s312
        %p314 = scmp.lt.s32.totalorder %s27, 0
        %s315 = scalar_select %p314, %s27, 0
        %s316 = smul.addr %s315, 4
        %s317 = scalar_lea.vmem %s2, %s316
        %p318 = scmp.lt.s32.totalorder %s27, 0
        %s319 = scalar_select %p318, %s27, 0
        %s320 = smul.addr %s319, 4
        %s321 = scalar_lea.vmem %s3, %s320
        %p322 = scmp.lt.s32.totalorder %s27, 0
        %s323 = scalar_select %p322, %s27, 0
        %s324 = smul.addr %s323, 4
        %s325 = scalar_lea.vmem %s4, %s324
        %p326 = scmp.eq.s32.totalorder %s28, 0
        %p327 = scmp.eq.s32.totalorder %s29, 0
        %p328 = pnand %p326, %p327
        %p329 = pneg %p328
        // Predicated region
        $region37: #{tpu_custom_call.1} parent=27 // pred_check
          _
        $region38: #{tpu_custom_call.1} parent=27 // pred_check_branch
          %331 = sbr.rel (%p328) target = $region40
        $region39: #{tpu_custom_call.1} parent=27 // pred_region
          %vm332 = vcmask 3072
          %333 = vst.msk [vmem:[%s317] sm:$0xf] %vm332, 0.0
          %334 = vst.msk [vmem:[%s321] sm:$0xf] %vm332, 0.0
          %335 = vst.msk [vmem:[%s325] sm:$0xf] %vm332, 0.0
        $region40: #{tpu_custom_call.1} parent=27 // pred_fallthru
          _
        %v336 = vld [vmem:[%s260] sm:$0xff]
        %v337 = vld [vmem:[%s269] sm:$0x3]
        %s338 = sadd.s32 %s27, %s29
        %s339 = smul.u32 %s338, 256
        %s340 = ssub.s32 256, %s339
        %v341 = vlaneseq
        %v342 = vand.u32 %v341, 127
        %v343 = vadd.s32 %v342, 128
        %v344 = vstv %s340
        %vm345 = vcmp.lt.s32.totalorder %v342, %v344
        %vm346 = vcmp.lt.s32.totalorder %v343, %v344
        %v347 = vlaneseq
        %v348 = vshrl.u32 %v347, 7
        %v349 = vsub.s32 0, %v348
        %v350 = vrot.slane %v337, %v349
        %v351 = vlaneseq
        %v352 = vshrl.u32 %v351, 7
        %v353 = vsub.s32 1, %v352
        %v354 = vrot.slane %v337, %v353
        %v355 = vsel %vm345, %v350, 4294967295
        %v356 = vsel %vm346, %v354, 4294967295
        %v357 = vlaneseq
        %v358 = vshrl.u32 %v357, 7
        %v359 = vlaneseq
        %v360 = vshrl.u32 %v359, 7
        %v361 = vsub.s32 0, %v360
        %v362 = vrot.slane %v355, %v361
        %v363 = vlaneseq
        %v364 = vshrl.u32 %v363, 7
        %v365 = vsub.s32 0, %v364
        %v366 = vrot.slane %v356, %v365
        %vm367 = vcmp.eq.s32.totalorder %v362, %v358
        %vm368 = vcmp.eq.s32.totalorder %v366, %v358
        %v369 = vsel %vm367, 1, 0
        %v370 = vsel %vm368, 1, 0
        %v371 = vcvt.s32.f32 %v369
        %v372 = vcvt.s32.f32 %v370
        %v373 = vsel %vm345, 1, 0
        %v374 = vsel %vm346, 1, 0
        %vm375 = vcmp.eq.s32.totalorder %v373, 1
        %vm376 = vcmp.eq.s32.totalorder %v374, 1
        %v378 = vcombine.high %v336, %v336
        %v380 = vsel %vm375, %v336, 0.0
        %v381 = vsel %vm376, %v378, 0.0
        %v382 = vld [vmem:[%s317] sm:$0xf]
        %v383 = vmul.f32 %v380, %v371
        %v384 = vmul.f32 %v381, %v372
        %vm385 = vcmask 1043456
        %v386 = vsel %vm385, %v383, 0.0
        %v387 = vsel %vm385, %v384, 0.0
        %v388 = vadd.f32 %v386, %v387
        %389 = vadd.xlane.f32.xlu0 %v388
        %v390 = vpop.xlane.xlu0 %389
        %v391 = vadd.f32 %v382, %v390
        %vm392 = vcmask 3072
        %393 = vst.msk [vmem:[%s317] sm:$0xf] %vm392, %v391
        %v394 = vld [vmem:[%s321] sm:$0xf]
        %v395 = vsel %vm385, %v371, 0.0
        %v396 = vsel %vm385, %v372, 0.0
        %v397 = vadd.f32 %v395, %v396
        %398 = vadd.xlane.f32.xlu0 %v397
        %v399 = vpop.xlane.xlu0 %398
        %v400 = vadd.f32 %v394, %v399
        %401 = vst.msk [vmem:[%s321] sm:$0xf] %vm392, %v400
        %v402 = vld [vmem:[%s325] sm:$0xf]
        %v403 = vmul.f32 %v380, %v380
        %v404 = vmul.f32 %v381, %v381
        %v405 = vsel %vm385, %v403, 0.0
        %v406 = vsel %vm385, %v404, 0.0
        %v407 = vadd.f32 %v405, %v406
        %408 = vadd.xlane.f32.xlu0 %v407
        %v409 = vpop.xlane.xlu0 %408
        %v410 = vadd.f32 %v402, %v409
        %411 = vst.msk [vmem:[%s325] sm:$0xf] %vm392, %v410
        %p412 = scmp.lt.s32.totalorder %s27, 0
        %s413 = scalar_select %p412, %s27, 0
        %s414 = smul.addr %s413, 4
        %s415 = scalar_lea.vmem %s2, %s414
        %p416 = scmp.lt.s32.totalorder %s27, 0
        %s417 = scalar_select %p416, %s27, 0
        %s418 = smul.addr %s417, 4
        %s419 = scalar_lea.vmem %s3, %s418
        %p420 = scmp.lt.s32.totalorder %s27, 0
        %s421 = scalar_select %p420, %s27, 0
        %s422 = smul.addr %s421, 4
        %s423 = scalar_lea.vmem %s4, %s422
        // Predicated region
        $region41: #{tpu_custom_call.1} parent=27 // pred_check
          %p424 = pneg %p127
        $region42: #{tpu_custom_call.1} parent=27 // pred_check_branch
          %426 = sbr.rel (%p424) target = $region44
        $region43: #{tpu_custom_call.1} parent=27 // pred_region
          _
        $region44: #{tpu_custom_call.1} parent=27 // pred_fallthru
          _
        // Predicated region
        $region45: #{tpu_custom_call.1} parent=27 // pred_check
          %p427 = pneg %p153
        $region46: #{tpu_custom_call.1} parent=27 // pred_check_branch
          %429 = sbr.rel (%p427) target = $region48
        $region47: #{tpu_custom_call.1} parent=27 // pred_region
          _
        $region48: #{tpu_custom_call.1} parent=27 // pred_fallthru
          _
        // Predicated region
        $region49: #{tpu_custom_call.1} parent=27 // pred_check
          %p430 = pneg %p179
        $region50: #{tpu_custom_call.1} parent=27 // pred_check_branch
          %432 = sbr.rel (%p430) target = $region52
        $region51: #{tpu_custom_call.1} parent=27 // pred_region
          _
        $region52: #{tpu_custom_call.1} parent=27 // pred_fallthru
          _
        // Predicated region
        $region53: #{tpu_custom_call.1} parent=27 // pred_check
          %p433 = pneg %p127
        $region54: #{tpu_custom_call.1} parent=27 // pred_check_branch
          %435 = sbr.rel (%p433) target = $region56
        $region55: #{tpu_custom_call.1} parent=27 // pred_region
          %p436 = scmp.lt.s32.totalorder %s27, 0
          %s437 = scalar_select %p436, %s27, 0
          %s438 = smul.addr %s437, 4
          %s439 = scalar_lea.vmem %s2, %s438
        $region56: #{tpu_custom_call.1} parent=27 // pred_fallthru
          _
        // Predicated region
        $region57: #{tpu_custom_call.1} parent=27 // pred_check
          %p440 = pneg %p153
        $region58: #{tpu_custom_call.1} parent=27 // pred_check_branch
          %442 = sbr.rel (%p440) target = $region60
        $region59: #{tpu_custom_call.1} parent=27 // pred_region
          %p443 = scmp.lt.s32.totalorder %s27, 0
          %s444 = scalar_select %p443, %s27, 0
          %s445 = smul.addr %s444, 4
          %s446 = scalar_lea.vmem %s3, %s445
        $region60: #{tpu_custom_call.1} parent=27 // pred_fallthru
          _
        // Predicated region
        $region61: #{tpu_custom_call.1} parent=27 // pred_check
          %p447 = pneg %p179
        $region62: #{tpu_custom_call.1} parent=27 // pred_check_branch
          %449 = sbr.rel (%p447) target = $region64
        $region63: #{tpu_custom_call.1} parent=27 // pred_region
          %p450 = scmp.lt.s32.totalorder %s27, 0
          %s451 = scalar_select %p450, %s27, 0
          %s452 = smul.addr %s451, 4
          %s453 = scalar_lea.vmem %s4, %s452
        $region64: #{tpu_custom_call.1} parent=27 // pred_fallthru
          _
      $region28: #{tpu_custom_call.1} parent=5 // pred_fallthru
        _
      %p454 = scmp.le.s32.totalorder 2, %s17
      // Predicated region
      $region65: #{tpu_custom_call.1} parent=5 // pred_check
        %p455 = pneg %p454
      $region66: #{tpu_custom_call.1} parent=5 // pred_check_branch
        %457 = sbr.rel (%p455) target = $region68
      $region67: #{tpu_custom_call.1} parent=5 // pred_region
        %s458 = ssub.s32 %s17, 2
      $region68: #{tpu_custom_call.1} parent=5 // pred_fallthru
        _
    $region6: #{tpu_custom_call.1} parent=1 // loop_footer
      %s21 = sadd.s32 1, %s17
    $region7: #{tpu_custom_call.1} parent=1 // loop_footer_branch
      %16 = sbr.rel target = $region3
    $region8: #{tpu_custom_call.1} parent=1 // loop_exit
      _
    %459 = vsyncpa [#allocation3], 1
    %s460 = scalar_lea.sflag [#allocation3], 1
    %461 = vsyncpa %s460, 1
    %462 = vsyncpa [#allocation5], 1
    %s463 = scalar_lea.sflag [#allocation5], 1
    %464 = vsyncpa %s463, 1

</llo_original>
